<compile_context>
chip_gen: v6e
topology: v6e:2x2x1
jax: 0.10.0
libtpu: 0.0.40
codegen_flags: <defaults>
</compile_context>

<pallas_src>
import jax
import jax.numpy as jnp
from jax.experimental import pallas as pl
from jax.experimental.pallas import tpu as pltpu

# ---- shapes implied by the module -------------------------------------------
L_IN = 126                  # deconv1 input length
K1 = 10                     # deconv1 kernel size
L1 = L_IN + K1 - 1          # 135 = deconv1 output length = unpool input length
L_UNPOOL = 271              # hard-coded output_size in forward()
K2 = 30                     # deconv2 kernel size
L_OUT = L_UNPOOL + K2 - 1   # 300

# lane-dense (multiple-of-128) padded lengths
L_IN_PAD = 128
L1_PAD = 256
L_OUT_PAD = 384


def _round_up(n, m):
    return pl.cdiv(n, m) * m


def word_decoder_kernel(x_ref, pick_ref, t1_ref, t2_ref, out_ref):
    # x_ref:    (TM, 128)  f32 VMEM  input rows, zero-padded past 126,
    #                               lane 127 forced to 1.0 (bias-1 carrier)
    # pick_ref: (TM, 256)  i32 VMEM  idx - 2*lane (0/1 for valid slots, -1 for
    #                               padding), lane 255 forced to 0 (bias-2 lane)
    # t1_ref:   (128, 256) f32 VMEM  deconv1 Toeplitz, b1 folded into row 127,
    #                               t1[127,255]=1.0 feeds the bias-2 lane
    # t2_ref:   (512, 384) f32 VMEM  stacked [even ; odd] unpool∘deconv2
    #                               Toeplitz, b2 folded into row 255
    # out_ref:  (TM, 384)  f32 VMEM  deconv2 output rows, valid in [0, 300)

    # deconv1 (+ bias1 via the 1.0 lane): one MXU GEMM.
    y1 = jnp.dot(x_ref[...], t1_ref[...],
                 preferred_element_type=jnp.float32)            # (TM, 256)

    # MaxUnpool1d(2): slot i scatters y1[i] to position 2*i + pick[i].
    pick = pick_ref[...]
    even = jnp.where(pick == 0, y1, 0.0)                        # (TM, 256)
    odd = jnp.where(pick == 1, y1, 0.0)                         # (TM, 256)

    # deconv2 (+ bias2 via row 255) with the unpool scatter folded into the
    # stacked parity-strided Toeplitz matrix: one MXU GEMM.
    out_ref[...] = jnp.dot(jnp.concatenate([even, odd], axis=1), t2_ref[...],
                           preferred_element_type=jnp.float32)  # (TM, 384)


def _strided_toeplitz(w, valid_rows, rows_pad, cols_pad, stride, offset):
    """T[i, j] = w[j - stride*i - offset] if the tap index is in range and
    i < valid_rows, else 0.  Built once per model in make_word_decoder()."""
    k = w.shape[0]
    rows = jnp.arange(rows_pad, dtype=jnp.int32)[:, None]
    cols = jnp.arange(cols_pad, dtype=jnp.int32)[None, :]
    d = cols - stride * rows - offset
    valid = (d >= 0) & (d < k) & (rows < valid_rows)
    return jnp.where(valid, w[jnp.clip(d, 0, k - 1)], 0.0).astype(jnp.float32)


def make_word_decoder(w1, b1, w2, b2, *, max_tile=256):
    """Build the decoder once for fixed weights.

    Returns a jitted decode(inp, i1):
      inp: (B, 1, 126) f32, i1: (B, 1, 135) int -> (B, 1, 300) f32
    (B=1 reproduces the PyTorch module's forward exactly.)

    max_tile: batch-tile rows per grid step; 256 suits v6e/v7x MXU rows,
    use 128 on v5e.  Must be a multiple of 8.
    """
    assert max_tile % 8 == 0

    w1f = jnp.asarray(w1, jnp.float32).reshape(K1)
    w2f = jnp.asarray(w2, jnp.float32).reshape(K2)
    b1f = jnp.asarray(b1, jnp.float32).reshape(())
    b2f = jnp.asarray(b2, jnp.float32).reshape(())

    # ---- weight-only constants, built once (not per call) -------------------
    # deconv1 Toeplitz; bias1 folded into row 127 (driven by x lane 127 == 1.0),
    # plus a 1.0 at column 255 that feeds the bias-2 lane of y1.
    t1 = _strided_toeplitz(w1f, L_IN, L_IN_PAD, L1_PAD, 1, 0)
    t1 = t1.at[L_IN_PAD - 1, :L1].set(b1f)
    t1 = t1.at[L_IN_PAD - 1, L1_PAD - 1].set(1.0)

    # stacked (unpool ∘ deconv2) Toeplitz: even half then odd half; bias2
    # folded into even-half row 255 (driven by pick lane 255 == 0, y1 lane
    # 255 == 1.0).
    t2e = _strided_toeplitz(w2f, L1, L1_PAD, L_OUT_PAD, 2, 0)
    t2o = _strided_toeplitz(w2f, L1, L1_PAD, L_OUT_PAD, 2, 1)
    t2e = t2e.at[L1_PAD - 1, :L_OUT].set(b2f)
    t2 = jnp.concatenate([t2e, t2o], axis=0)            # (512, 384)

    lane = jnp.arange(L1, dtype=jnp.int32)

    @jax.jit
    def decode(inp, i1):
        B = inp.shape[0]
        tile = min(max_tile, _round_up(B, 8))
        b_pad = _round_up(B, tile)
        grid = (b_pad // tile,)

        # lane-dense padded rows; padded batch rows stay all-zero / pick=-1
        # so they produce exact zeros and are sliced off below.
        x = jnp.zeros((b_pad, L_IN_PAD), jnp.float32)
        x = x.at[:B, :L_IN].set(inp.reshape(B, L_IN).astype(jnp.float32))
        x = x.at[:B, L_IN_PAD - 1].set(1.0)              # bias-1 carrier lane

        pick = jnp.full((b_pad, L1_PAD), -1, jnp.int32)
        pick = pick.at[:B, :L1].set(
            i1.reshape(B, L1).astype(jnp.int32) - 2 * lane[None, :])
        pick = pick.at[:B, L1_PAD - 1].set(0)            # bias-2 lane -> even

        out = pl.pallas_call(
            word_decoder_kernel,
            out_shape=jax.ShapeDtypeStruct((b_pad, L_OUT_PAD), jnp.float32),
            grid=grid,
            in_specs=[
                pl.BlockSpec((tile, L_IN_PAD), lambda b: (b, 0)),    # x rows
                pl.BlockSpec((tile, L1_PAD), lambda b: (b, 0)),      # pick rows
                pl.BlockSpec((L_IN_PAD, L1_PAD), lambda b: (0, 0)),  # t1 (resident)
                pl.BlockSpec((2 * L1_PAD, L_OUT_PAD), lambda b: (0, 0)),  # t2 (resident)
            ],
            out_specs=pl.BlockSpec((tile, L_OUT_PAD), lambda b: (b, 0)),
            compiler_params=pltpu.CompilerParams(
                dimension_semantics=("parallel",)),
        )(x, pick, t1, t2)
        return out[:B, :L_OUT].reshape(B, 1, L_OUT)

    return decode


def reference(inp, i1, w1, b1, w2, b2):
    """Plain-JAX reference mirroring the PyTorch forward, vmapped over words."""
    w1f = jnp.asarray(w1, jnp.float32).reshape(K1)
    w2f = jnp.asarray(w2, jnp.float32).reshape(K2)

    def one(x, idx):
        y1 = jnp.convolve(x, w1f, mode="full") + b1                  # (135,)
        unpooled = jnp.zeros(L_UNPOOL, jnp.float32).at[idx].set(y1)  # (271,)
        return jnp.convolve(unpooled, w2f, mode="full") + b2         # (300,)

    B = inp.shape[0]
    out = jax.vmap(one)(inp.reshape(B, L_IN).astype(jnp.float32),
                        i1.reshape(B, L1).astype(jnp.int32))
    return out.reshape(B, 1, L_OUT)


if __name__ == "__main__":
    key = jax.random.PRNGKey(0)
    k_in, k_w1, k_b1, k_w2, k_b2, k_idx = jax.random.split(key, 6)

    # ConvTranspose1d(1,1,K) parameters: weight (1,1,K), bias scalar.
    bound1 = 1.0 / (K1 ** 0.5)
    w1 = jax.random.uniform(k_w1, (1, 1, K1), jnp.float32, -bound1, bound1)
    b1 = jax.random.uniform(k_b1, (1,), jnp.float32, -bound1, bound1)[0]
    bound2 = 1.0 / (K2 ** 0.5)
    w2 = jax.random.uniform(k_w2, (1, 1, K2), jnp.float32, -bound2, bound2)
    b2 = jax.random.uniform(k_b2, (1,), jnp.float32, -bound2, bound2)[0]

    # Decoder built once per model (Toeplitz constants cached, pipeline jitted).
    # max_tile=8 keeps the per-step tile tiny so this small demo batch still
    # exercises a multi-step "parallel" grid; production default is 256
    # (v6e/v7x), 128 on v5e.
    decode = make_word_decoder(w1, b1, w2, b2, max_tile=8)

    # --- 1) module-exact single word: (1,1,126) + (1,1,135) -> (1,1,300) -----
    inp1 = jax.random.normal(k_in, (1, 1, L_IN), jnp.float32)
    pick1 = jax.random.bernoulli(k_idx, 0.5, (1, 1, L1)).astype(jnp.int32)
    i1_single = 2 * jnp.arange(L1, dtype=jnp.int32)[None, None, :] + pick1
    out1 = jax.block_until_ready(decode(inp1, i1_single))
    ref1 = reference(inp1, i1_single, w1, b1, w2, b2)
    assert out1.shape == (1, 1, L_OUT), out1.shape
    assert jnp.allclose(out1, ref1, rtol=1e-4, atol=1e-3), \
        float(jnp.max(jnp.abs(out1 - ref1)))

    # --- 2) batched: 20 words -> 3 parallel batch tiles of 8 rows ------------
    B = 20
    k_in2, k_idx2 = jax.random.split(k_in)
    inp_b = jax.random.normal(k_in2, (B, 1, L_IN), jnp.float32)
    pick_b = jax.random.bernoulli(k_idx2, 0.5, (B, 1, L1)).astype(jnp.int32)
    i1_b = 2 * jnp.arange(L1, dtype=jnp.int32)[None, None, :] + pick_b
    out_b = jax.block_until_ready(decode(inp_b, i1_b))
    ref_b = reference(inp_b, i1_b, w1, b1, w2, b2)
    assert out_b.shape == (B, 1, L_OUT), out_b.shape
    assert jnp.allclose(out_b, ref_b, rtol=1e-4, atol=1e-3), \
        float(jnp.max(jnp.abs(out_b - ref_b)))

    print("KERNEL_OK")
</pallas_src>

<mosaic_0001>
module attributes {stable_mosaic.version = 11 : i64} {
  func.func @word_decoder_kernel(%arg0: i32, %arg1: memref<8x128xf32, #tpu.memory_space<vmem>>, %arg2: memref<8x256xi32, #tpu.memory_space<vmem>>, %arg3: memref<128x256xf32, #tpu.memory_space<vmem>>, %arg4: memref<512x384xf32, #tpu.memory_space<vmem>>, %arg5: memref<8x384xf32, #tpu.memory_space<vmem>>) attributes {dimension_semantics = [#tpu.dimension_semantics<parallel>], iteration_bounds = array<i64: 1>, scalar_prefetch = 0 : i64, scratch_operands = 0 : i64, tpu.core_type = #tpu.core_type<tc>, window_params = [{transform_indices = @transform_0, window_bounds = array<i64: 8, 128>}, {transform_indices = @transform_1, window_bounds = array<i64: 8, 256>}, {pipeline_mode = #tpu.pipeline_mode<synchronous>, transform_indices = @transform_2, window_bounds = array<i64: 128, 256>}, {pipeline_mode = #tpu.pipeline_mode<synchronous>, transform_indices = @transform_3, window_bounds = array<i64: 512, 384>}, {transform_indices = @transform_4, window_bounds = array<i64: 8, 384>}]} {
    %c0 = arith.constant 0 : index
    %c0_0 = arith.constant 0 : index
    %0 = vector.load %arg1[%c0, %c0_0] : memref<8x128xf32, #tpu.memory_space<vmem>>, vector<8x128xf32>
    %c0_1 = arith.constant 0 : index
    %c0_2 = arith.constant 0 : index
    %1 = vector.load %arg3[%c0_1, %c0_2] : memref<128x256xf32, #tpu.memory_space<vmem>>, vector<128x256xf32>
    %cst = arith.constant dense<0.000000e+00> : vector<8x256xf32>
    %2 = tpu.matmul %0, %1, %cst {dimension_numbers = #tpu.dot_dimension_numbers<[1], [0], [0], [1], [0, 0, 1, 1], [], []>} : vector<8x128xf32>, vector<128x256xf32>, vector<8x256xf32> -> vector<8x256xf32>
    %c0_3 = arith.constant 0 : index
    %c0_4 = arith.constant 0 : index
    %3 = vector.load %arg2[%c0_3, %c0_4] : memref<8x256xi32, #tpu.memory_space<vmem>>, vector<8x256xi32>
    %c0_i32 = arith.constant 0 : i32
    %4 = vector.broadcast %c0_i32 : i32 to vector<8x256xi32>
    %5 = arith.cmpi eq, %3, %4 : vector<8x256xi32>
    %cst_5 = arith.constant 0.000000e+00 : f32
    %6 = vector.broadcast %cst_5 : f32 to vector<8x256xf32>
    %7 = arith.select %5, %2, %6 : vector<8x256xi1>, vector<8x256xf32>
    %c1_i32 = arith.constant 1 : i32
    %8 = vector.broadcast %c1_i32 : i32 to vector<8x256xi32>
    %9 = arith.cmpi eq, %3, %8 : vector<8x256xi32>
    %cst_6 = arith.constant 0.000000e+00 : f32
    %10 = vector.broadcast %cst_6 : f32 to vector<8x256xf32>
    %11 = arith.select %9, %2, %10 : vector<8x256xi1>, vector<8x256xf32>
    %12 = tpu.concatenate %7, %11 in 1 : vector<8x256xf32>, vector<8x256xf32> -> vector<8x512xf32>
    %c0_7 = arith.constant 0 : index
    %c0_8 = arith.constant 0 : index
    %13 = vector.load %arg4[%c0_7, %c0_8] : memref<512x384xf32, #tpu.memory_space<vmem>>, vector<512x384xf32>
    %cst_9 = arith.constant dense<0.000000e+00> : vector<8x384xf32>
    %14 = tpu.matmul %12, %13, %cst_9 {dimension_numbers = #tpu.dot_dimension_numbers<[1], [0], [0], [1], [0, 0, 1, 1], [], []>} : vector<8x512xf32>, vector<512x384xf32>, vector<8x384xf32> -> vector<8x384xf32>
    %c0_10 = arith.constant 0 : index
    %c0_11 = arith.constant 0 : index
    %15 = vector.load %arg5[%c0_10, %c0_11] : memref<8x384xf32, #tpu.memory_space<vmem>>, vector<8x384xf32>
    tpu.vector_store %arg5[%c0_10, %c0_11], %14 {strides = array<i32>} : memref<8x384xf32, #tpu.memory_space<vmem>>, vector<8x384xf32>,
    return
  }
  func.func @transform_0(%arg0: i32) -> (i32, i32) {
    %c0_i32 = arith.constant 0 : i32
    %c0_i32_0 = arith.constant 0 : i32
    return %arg0, %c0_i32 : i32, i32
  }
  func.func @transform_1(%arg0: i32) -> (i32, i32) {
    %c0_i32 = arith.constant 0 : i32
    %c0_i32_0 = arith.constant 0 : i32
    return %arg0, %c0_i32 : i32, i32
  }
  func.func @transform_2(%arg0: i32) -> (i32, i32) {
    %c0_i32 = arith.constant 0 : i32
    %c0_i32_0 = arith.constant 0 : i32
    %c0_i32_1 = arith.constant 0 : i32
    return %c0_i32, %c0_i32_0 : i32, i32
  }
  func.func @transform_3(%arg0: i32) -> (i32, i32) {
    %c0_i32 = arith.constant 0 : i32
    %c0_i32_0 = arith.constant 0 : i32
    %c0_i32_1 = arith.constant 0 : i32
    return %c0_i32, %c0_i32_0 : i32, i32
  }
  func.func @transform_4(%arg0: i32) -> (i32, i32) {
    %c0_i32 = arith.constant 0 : i32
    %c0_i32_0 = arith.constant 0 : i32
    return %arg0, %c0_i32 : i32, i32
  }
}

</mosaic_0001>

<llo_original>
// kernel: decode.1
$region0: #{decode.1}
  #allocation0 [shape = 'u32[]', space=smem, size = 0x4, offset = 0x4, fixed_abs, tag = 'smem constant byte address 0x4 - core index']
  #allocation1 [shape = 'u32[144,128]{1,0:T(1,128)}', space=vmem, size = 0x12000, scoped, tag = 'internal scratch']
  %s0 = inlined_call_operand.vmem [shape: f32[8,128], index: 0, kind: input, shape index: {}]
  %s1 = inlined_call_operand.vmem [shape: s32[8,256], index: 1, kind: input, shape index: {}]
  %s2 = inlined_call_operand.hbm [shape: f32[128,256], index: 2, kind: input, shape index: {}]
  %s3 = inlined_call_operand.hbm [shape: f32[512,384], index: 3, kind: input, shape index: {}]
  %s4 = inlined_call_operand.vmem [shape: f32[8,384], index: 4, kind: output, shape index: {}]
  %s5 = sld [smem:[#allocation0]]
  $region34: #{decode.1} parent=0
    _
  %s7 = ssub.s32 1, %s5
  %s8 = scalar_select 0, %s7, %s5
  $region1: #{decode.1} parent=0
    #allocation2 [shape = 'u8[131072]{0}', space=vmem, size = 0x20000, scoped, tag = 'input window, operand 2, single buffered']
    #allocation3 [shape = 's32[1]{0}', space=sflag, size = 0x4, scoped, tag = 'scoped memory for decode.1']
    #allocation4 [shape = 'u8[786432]{0}', space=vmem, size = 0xc0000, scoped, tag = 'input window, operand 3, single buffered']
    #allocation5 [shape = 's32[1]{0}', space=sflag, size = 0x4, scoped, tag = 'scoped memory for decode.1']
    %9 = vsyncpa [#allocation3], 0
    %10 = vsyncpa [#allocation5], 0
    // Predicated region
    $region2: #{decode.1} parent=1 // pred_check
      _
    $region3: #{decode.1} parent=1 // pred_check_branch
      %12 = sbr.rel (0) target = $region5
    $region4: #{decode.1} parent=1 // pred_region
      _
    $region5: #{decode.1} parent=1 // pred_fallthru
      _
    // Predicated region
    $region6: #{decode.1} parent=1 // pred_check
      _
    $region7: #{decode.1} parent=1 // pred_check_branch
      %14 = sbr.rel (0) target = $region9
    $region8: #{decode.1} parent=1 // pred_region
      _
    $region9: #{decode.1} parent=1 // pred_fallthru
      _
    // Predicated region
    $region10: #{decode.1} parent=1 // pred_check
      _
    $region11: #{decode.1} parent=1 // pred_check_branch
      %16 = sbr.rel (0) target = $region13
    $region12: #{decode.1} parent=1 // pred_region
      %s18 = ssub.s32 4096, 4096
      %19 = vsyncadd [#allocation3], %s18
      %s20 = sshll.u32 [#allocation2], 4
      %s21 = int_to_ptr.vmem [resolvable:$true] %s20
      %26 = dma.hbm_to_vmem [thread:$0]  %s2, 4096, %s21, [#allocation3], 256, 256, 16
    $region13: #{decode.1} parent=1 // pred_fallthru
      _
    // Predicated region
    $region14: #{decode.1} parent=1 // pred_check
      _
    $region15: #{decode.1} parent=1 // pred_check_branch
      %28 = sbr.rel (0) target = $region17
    $region16: #{decode.1} parent=1 // pred_region
      %s30 = ssub.s32 24576, 24576
      %31 = vsyncadd [#allocation5], %s30
      %s32 = sshll.u32 [#allocation4], 4
      %s33 = int_to_ptr.vmem [resolvable:$true] %s32
      %38 = dma.hbm_to_vmem [thread:$0]  %s3, 24576, %s33, [#allocation5], 384, 384, 24
    $region17: #{decode.1} parent=1 // pred_fallthru
      _
    // Predicated region
    $region18: #{decode.1} parent=1 // pred_check
      _
    $region19: #{decode.1} parent=1 // pred_check_branch
      %40 = sbr.rel (0) target = $region21
    $region20: #{decode.1} parent=1 // pred_region
      %41 = dma.done [#allocation3], 4096
    $region21: #{decode.1} parent=1 // pred_fallthru
      _
    // Predicated region
    $region22: #{decode.1} parent=1 // pred_check
      _
    $region23: #{decode.1} parent=1 // pred_check_branch
      %43 = sbr.rel (0) target = $region25
    $region24: #{decode.1} parent=1 // pred_region
      %44 = dma.done [#allocation5], 24576
    $region25: #{decode.1} parent=1 // pred_fallthru
      _
    %v45 = vld [vmem:[%s0] sm:$0xff]
    %v46 = vld [vmem:[#allocation2] sm:$0xff]
    %v47 = vld [vmem:[#allocation2 + $0x8] sm:$0xff]
    %v48 = vld [vmem:[#allocation2 + $0x10] sm:$0xff]
    %v49 = vld [vmem:[#allocation2 + $0x18] sm:$0xff]
    %v50 = vld [vmem:[#allocation2 + $0x20] sm:$0xff]
    %v51 = vld [vmem:[#allocation2 + $0x28] sm:$0xff]
    %v52 = vld [vmem:[#allocation2 + $0x30] sm:$0xff]
    %v53 = vld [vmem:[#allocation2 + $0x38] sm:$0xff]
    %v54 = vld [vmem:[#allocation2 + $0x40] sm:$0xff]
    %v55 = vld [vmem:[#allocation2 + $0x48] sm:$0xff]
    %v56 = vld [vmem:[#allocation2 + $0x50] sm:$0xff]
    %v57 = vld [vmem:[#allocation2 + $0x58] sm:$0xff]
    %v58 = vld [vmem:[#allocation2 + $0x60] sm:$0xff]
    %v59 = vld [vmem:[#allocation2 + $0x68] sm:$0xff]
    %v60 = vld [vmem:[#allocation2 + $0x70] sm:$0xff]
    %v61 = vld [vmem:[#allocation2 + $0x78] sm:$0xff]
    %v62 = vld [vmem:[#allocation2 + $0x80] sm:$0xff]
    %v63 = vld [vmem:[#allocation2 + $0x88] sm:$0xff]
    %v64 = vld [vmem:[#allocation2 + $0x90] sm:$0xff]
    %v65 = vld [vmem:[#allocation2 + $0x98] sm:$0xff]
    %v66 = vld [vmem:[#allocation2 + $0xa0] sm:$0xff]
    %v67 = vld [vmem:[#allocation2 + $0xa8] sm:$0xff]
    %v68 = vld [vmem:[#allocation2 + $0xb0] sm:$0xff]
    %v69 = vld [vmem:[#allocation2 + $0xb8] sm:$0xff]
    %v70 = vld [vmem:[#allocation2 + $0xc0] sm:$0xff]
    %v71 = vld [vmem:[#allocation2 + $0xc8] sm:$0xff]
    %v72 = vld [vmem:[#allocation2 + $0xd0] sm:$0xff]
    %v73 = vld [vmem:[#allocation2 + $0xd8] sm:$0xff]
    %v74 = vld [vmem:[#allocation2 + $0xe0] sm:$0xff]
    %v75 = vld [vmem:[#allocation2 + $0xe8] sm:$0xff]
    %v76 = vld [vmem:[#allocation2 + $0xf0] sm:$0xff]
    %v77 = vld [vmem:[#allocation2 + $0xf8] sm:$0xff]
    %78 = vmatprep.subr.mxu0 %v77
    %79 = vmatpush1.msra.mxu0 %v76
    %80 = vmatprep.subr.mxu0 %v75
    %81 = vmatpush1.msra.mxu0 %v74
    %82 = vmatprep.subr.mxu0 %v73
    %83 = vmatpush1.msra.mxu0 %v72
    %84 = vmatprep.subr.mxu0 %v71
    %85 = vmatpush1.msra.mxu0 %v70
    %86 = vmatprep.subr.mxu0 %v69
    %87 = vmatpush1.msra.mxu0 %v68
    %88 = vmatprep.subr.mxu0 %v67
    %89 = vmatpush1.msra.mxu0 %v66
    %90 = vmatprep.subr.mxu0 %v65
    %91 = vmatpush1.msra.mxu0 %v64
    %92 = vmatprep.subr.mxu0 %v63
    %93 = vmatpush1.msra.mxu0 %v62
    %94 = vmatprep.subr.mxu0 %v61
    %95 = vmatpush1.msra.mxu0 %v60
    %96 = vmatprep.subr.mxu0 %v59
    %97 = vmatpush1.msra.mxu0 %v58
    %98 = vmatprep.subr.mxu0 %v57
    %99 = vmatpush1.msra.mxu0 %v56
    %100 = vmatprep.subr.mxu0 %v55
    %101 = vmatpush1.msra.mxu0 %v54
    %102 = vmatprep.subr.mxu0 %v53
    %103 = vmatpush1.msra.mxu0 %v52
    %104 = vmatprep.subr.mxu0 %v51
    %105 = vmatpush1.msra.mxu0 %v50
    %106 = vmatprep.subr.mxu0 %v49
    %107 = vmatpush1.msra.mxu0 %v48
    %108 = vmatprep.subr.mxu0 %v47
    %109 = vmatpush1.msra.mxu0 %v46
    %110 = vmatprep.subr.mxu0 0.0
    %111 = vmatpush2.msra.mxu0 0.0
    %112 = vmatprep.subr.mxu0 0.0
    %113 = vmatpush2.msra.mxu0 0.0
    %114 = vmatprep.subr.mxu0 0.0
    %115 = vmatpush2.msra.mxu0 0.0
    %116 = vmatprep.subr.mxu0 0.0
    %117 = vmatpush2.msra.mxu0 0.0
    %118 = vmatprep.subr.mxu0 0.0
    %119 = vmatpush2.msra.mxu0 0.0
    %120 = vmatprep.subr.mxu0 0.0
    %121 = vmatpush2.msra.mxu0 0.0
    %122 = vmatprep.subr.mxu0 0.0
    %123 = vmatpush2.msra.mxu0 0.0
    %124 = vmatprep.subr.mxu0 0.0
    %125 = vmatpush2.msra.mxu0 0.0
    %126 = vmatprep.subr.mxu0 0.0
    %127 = vmatpush2.msra.mxu0 0.0
    %128 = vmatprep.subr.mxu0 0.0
    %129 = vmatpush2.msra.mxu0 0.0
    %130 = vmatprep.subr.mxu0 0.0
    %131 = vmatpush2.msra.mxu0 0.0
    %132 = vmatprep.subr.mxu0 0.0
    %133 = vmatpush2.msra.mxu0 0.0
    %134 = vmatprep.subr.mxu0 0.0
    %135 = vmatpush2.msra.mxu0 0.0
    %136 = vmatprep.subr.mxu0 0.0
    %137 = vmatpush2.msra.mxu0 0.0
    %138 = vmatprep.subr.mxu0 0.0
    %139 = vmatpush2.msra.mxu0 0.0
    %140 = vmatprep.subr.mxu0 0.0
    %141 = vmatpush2.msra.mxu0 0.0
    %142 = vmatprep.mubr.f32.mxu0 0.0
    %143 = vmatmul.mubr.f32.gmra.mxu0 %v45
    %v144 = vpop.f32.mrf.mxu0
    %v145 = vadd.f32 0.0, %v144
    %v146 = vpop.f32.mrf.mxu0
    %v147 = vadd.f32 0.0, %v146
    %148 = vdwg.mxu0
    %v149 = vld [vmem:[%s1] sm:$0xff]
    %v150 = vld [vmem:[%s1 + $0x8] sm:$0xff]
    %vm151 = vcmp.eq.s32.totalorder %v149, 0
    %vm152 = vcmp.eq.s32.totalorder %v150, 0
    %v153 = vsel %vm151, %v145, 0.0
    %v154 = vsel %vm152, %v147, 0.0
    %vm155 = vcmp.eq.s32.totalorder %v149, 1
    %vm156 = vcmp.eq.s32.totalorder %v150, 1
    %v157 = vsel %vm155, %v145, 0.0
    %v158 = vsel %vm156, %v147, 0.0
    %v159 = vld [vmem:[#allocation4] sm:$0xff]
    %v160 = vld [vmem:[#allocation4 + $0x8] sm:$0xff]
    %v161 = vld [vmem:[#allocation4 + $0x10] sm:$0xff]
    %v162 = vld [vmem:[#allocation4 + $0x18] sm:$0xff]
    %v163 = vld [vmem:[#allocation4 + $0x20] sm:$0xff]
    %v164 = vld [vmem:[#allocation4 + $0x28] sm:$0xff]
    %v165 = vld [vmem:[#allocation4 + $0x30] sm:$0xff]
    %v166 = vld [vmem:[#allocation4 + $0x38] sm:$0xff]
    %v167 = vld [vmem:[#allocation4 + $0x40] sm:$0xff]
    %v168 = vld [vmem:[#allocation4 + $0x48] sm:$0xff]
    %v169 = vld [vmem:[#allocation4 + $0x50] sm:$0xff]
    %v170 = vld [vmem:[#allocation4 + $0x58] sm:$0xff]
    %v171 = vld [vmem:[#allocation4 + $0x60] sm:$0xff]
    %v172 = vld [vmem:[#allocation4 + $0x68] sm:$0xff]
    %v173 = vld [vmem:[#allocation4 + $0x70] sm:$0xff]
    %v174 = vld [vmem:[#allocation4 + $0x78] sm:$0xff]
    %v175 = vld [vmem:[#allocation4 + $0x80] sm:$0xff]
    %v176 = vld [vmem:[#allocation4 + $0x88] sm:$0xff]
    %v177 = vld [vmem:[#allocation4 + $0x90] sm:$0xff]
    %v178 = vld [vmem:[#allocation4 + $0x98] sm:$0xff]
    %v179 = vld [vmem:[#allocation4 + $0xa0] sm:$0xff]
    %v180 = vld [vmem:[#allocation4 + $0xa8] sm:$0xff]
    %v181 = vld [vmem:[#allocation4 + $0xb0] sm:$0xff]
    %v182 = vld [vmem:[#allocation4 + $0xb8] sm:$0xff]
    %v183 = vld [vmem:[#allocation4 + $0xc0] sm:$0xff]
    %v184 = vld [vmem:[#allocation4 + $0xc8] sm:$0xff]
    %v185 = vld [vmem:[#allocation4 + $0xd0] sm:$0xff]
    %v186 = vld [vmem:[#allocation4 + $0xd8] sm:$0xff]
    %v187 = vld [vmem:[#allocation4 + $0xe0] sm:$0xff]
    %v188 = vld [vmem:[#allocation4 + $0xe8] sm:$0xff]
    %v189 = vld [vmem:[#allocation4 + $0xf0] sm:$0xff]
    %v190 = vld [vmem:[#allocation4 + $0xf8] sm:$0xff]
    %v191 = vld [vmem:[#allocation4 + $0x100] sm:$0xff]
    %v192 = vld [vmem:[#allocation4 + $0x108] sm:$0xff]
    %v193 = vld [vmem:[#allocation4 + $0x110] sm:$0xff]
    %v194 = vld [vmem:[#allocation4 + $0x118] sm:$0xff]
    %v195 = vld [vmem:[#allocation4 + $0x120] sm:$0xff]
    %v196 = vld [vmem:[#allocation4 + $0x128] sm:$0xff]
    %v197 = vld [vmem:[#allocation4 + $0x130] sm:$0xff]
    %v198 = vld [vmem:[#allocation4 + $0x138] sm:$0xff]
    %v199 = vld [vmem:[#allocation4 + $0x140] sm:$0xff]
    %v200 = vld [vmem:[#allocation4 + $0x148] sm:$0xff]
    %v201 = vld [vmem:[#allocation4 + $0x150] sm:$0xff]
    %v202 = vld [vmem:[#allocation4 + $0x158] sm:$0xff]
    %v203 = vld [vmem:[#allocation4 + $0x160] sm:$0xff]
    %v204 = vld [vmem:[#allocation4 + $0x168] sm:$0xff]
    %v205 = vld [vmem:[#allocation4 + $0x170] sm:$0xff]
    %v206 = vld [vmem:[#allocation4 + $0x178] sm:$0xff]
    %v207 = vld [vmem:[#allocation4 + $0x180] sm:$0xff]
    %v208 = vld [vmem:[#allocation4 + $0x188] sm:$0xff]
    %v209 = vld [vmem:[#allocation4 + $0x190] sm:$0xff]
    %v210 = vld [vmem:[#allocation4 + $0x198] sm:$0xff]
    %v211 = vld [vmem:[#allocation4 + $0x1a0] sm:$0xff]
    %v212 = vld [vmem:[#allocation4 + $0x1a8] sm:$0xff]
    %v213 = vld [vmem:[#allocation4 + $0x1b0] sm:$0xff]
    %v214 = vld [vmem:[#allocation4 + $0x1b8] sm:$0xff]
    %v215 = vld [vmem:[#allocation4 + $0x1c0] sm:$0xff]
    %v216 = vld [vmem:[#allocation4 + $0x1c8] sm:$0xff]
    %v217 = vld [vmem:[#allocation4 + $0x1d0] sm:$0xff]
    %v218 = vld [vmem:[#allocation4 + $0x1d8] sm:$0xff]
    %v219 = vld [vmem:[#allocation4 + $0x1e0] sm:$0xff]
    %v220 = vld [vmem:[#allocation4 + $0x1e8] sm:$0xff]
    %v221 = vld [vmem:[#allocation4 + $0x1f0] sm:$0xff]
    %v222 = vld [vmem:[#allocation4 + $0x1f8] sm:$0xff]
    %v223 = vld [vmem:[#allocation4 + $0x200] sm:$0xff]
    %v224 = vld [vmem:[#allocation4 + $0x208] sm:$0xff]
    %v225 = vld [vmem:[#allocation4 + $0x210] sm:$0xff]
    %v226 = vld [vmem:[#allocation4 + $0x218] sm:$0xff]
    %v227 = vld [vmem:[#allocation4 + $0x220] sm:$0xff]
    %v228 = vld [vmem:[#allocation4 + $0x228] sm:$0xff]
    %v229 = vld [vmem:[#allocation4 + $0x230] sm:$0xff]
    %v230 = vld [vmem:[#allocation4 + $0x238] sm:$0xff]
    %v231 = vld [vmem:[#allocation4 + $0x240] sm:$0xff]
    %v232 = vld [vmem:[#allocation4 + $0x248] sm:$0xff]
    %v233 = vld [vmem:[#allocation4 + $0x250] sm:$0xff]
    %v234 = vld [vmem:[#allocation4 + $0x258] sm:$0xff]
    %v235 = vld [vmem:[#allocation4 + $0x260] sm:$0xff]
    %v236 = vld [vmem:[#allocation4 + $0x268] sm:$0xff]
    %v237 = vld [vmem:[#allocation4 + $0x270] sm:$0xff]
    %v238 = vld [vmem:[#allocation4 + $0x278] sm:$0xff]
    %v239 = vld [vmem:[#allocation4 + $0x280] sm:$0xff]
    %v240 = vld [vmem:[#allocation4 + $0x288] sm:$0xff]
    %v241 = vld [vmem:[#allocation4 + $0x290] sm:$0xff]
    %v242 = vld [vmem:[#allocation4 + $0x298] sm:$0xff]
    %v243 = vld [vmem:[#allocation4 + $0x2a0] sm:$0xff]
    %v244 = vld [vmem:[#allocation4 + $0x2a8] sm:$0xff]
    %v245 = vld [vmem:[#allocation4 + $0x2b0] sm:$0xff]
    %v246 = vld [vmem:[#allocation4 + $0x2b8] sm:$0xff]
    %v247 = vld [vmem:[#allocation4 + $0x2c0] sm:$0xff]
    %v248 = vld [vmem:[#allocation4 + $0x2c8] sm:$0xff]
    %v249 = vld [vmem:[#allocation4 + $0x2d0] sm:$0xff]
    %v250 = vld [vmem:[#allocation4 + $0x2d8] sm:$0xff]
    %v251 = vld [vmem:[#allocation4 + $0x2e0] sm:$0xff]
    %v252 = vld [vmem:[#allocation4 + $0x2e8] sm:$0xff]
    %v253 = vld [vmem:[#allocation4 + $0x2f0] sm:$0xff]
    %v254 = vld [vmem:[#allocation4 + $0x2f8] sm:$0xff]
    %v255 = vld [vmem:[#allocation4 + $0x300] sm:$0xff]
    %v256 = vld [vmem:[#allocation4 + $0x308] sm:$0xff]
    %v257 = vld [vmem:[#allocation4 + $0x310] sm:$0xff]
    %v258 = vld [vmem:[#allocation4 + $0x318] sm:$0xff]
    %v259 = vld [vmem:[#allocation4 + $0x320] sm:$0xff]
    %v260 = vld [vmem:[#allocation4 + $0x328] sm:$0xff]
    %v261 = vld [vmem:[#allocation4 + $0x330] sm:$0xff]
    %v262 = vld [vmem:[#allocation4 + $0x338] sm:$0xff]
    %v263 = vld [vmem:[#allocation4 + $0x340] sm:$0xff]
    %v264 = vld [vmem:[#allocation4 + $0x348] sm:$0xff]
    %v265 = vld [vmem:[#allocation4 + $0x350] sm:$0xff]
    %v266 = vld [vmem:[#allocation4 + $0x358] sm:$0xff]
    %v267 = vld [vmem:[#allocation4 + $0x360] sm:$0xff]
    %v268 = vld [vmem:[#allocation4 + $0x368] sm:$0xff]
    %v269 = vld [vmem:[#allocation4 + $0x370] sm:$0xff]
    %v270 = vld [vmem:[#allocation4 + $0x378] sm:$0xff]
    %v271 = vld [vmem:[#allocation4 + $0x380] sm:$0xff]
    %v272 = vld [vmem:[#allocation4 + $0x388] sm:$0xff]
    %v273 = vld [vmem:[#allocation4 + $0x390] sm:$0xff]
    %v274 = vld [vmem:[#allocation4 + $0x398] sm:$0xff]
    %v275 = vld [vmem:[#allocation4 + $0x3a0] sm:$0xff]
    %v276 = vld [vmem:[#allocation4 + $0x3a8] sm:$0xff]
    %v277 = vld [vmem:[#allocation4 + $0x3b0] sm:$0xff]
    %v278 = vld [vmem:[#allocation4 + $0x3b8] sm:$0xff]
    %v279 = vld [vmem:[#allocation4 + $0x3c0] sm:$0xff]
    %v280 = vld [vmem:[#allocation4 + $0x3c8] sm:$0xff]
    %v281 = vld [vmem:[#allocation4 + $0x3d0] sm:$0xff]
    %v282 = vld [vmem:[#allocation4 + $0x3d8] sm:$0xff]
    %v283 = vld [vmem:[#allocation4 + $0x3e0] sm:$0xff]
    %v284 = vld [vmem:[#allocation4 + $0x3e8] sm:$0xff]
    %v285 = vld [vmem:[#allocation4 + $0x3f0] sm:$0xff]
    %v286 = vld [vmem:[#allocation4 + $0x3f8] sm:$0xff]
    %v287 = vld [vmem:[#allocation4 + $0x400] sm:$0xff]
    %v288 = vld [vmem:[#allocation4 + $0x408] sm:$0xff]
    %v289 = vld [vmem:[#allocation4 + $0x410] sm:$0xff]
    %v290 = vld [vmem:[#allocation4 + $0x418] sm:$0xff]
    %v291 = vld [vmem:[#allocation4 + $0x420] sm:$0xff]
    %v292 = vld [vmem:[#allocation4 + $0x428] sm:$0xff]
    %v293 = vld [vmem:[#allocation4 + $0x430] sm:$0xff]
    %v294 = vld [vmem:[#allocation4 + $0x438] sm:$0xff]
    %v295 = vld [vmem:[#allocation4 + $0x440] sm:$0xff]
    %v296 = vld [vmem:[#allocation4 + $0x448] sm:$0xff]
    %v297 = vld [vmem:[#allocation4 + $0x450] sm:$0xff]
    %v298 = vld [vmem:[#allocation4 + $0x458] sm:$0xff]
    %v299 = vld [vmem:[#allocation4 + $0x460] sm:$0xff]
    %v300 = vld [vmem:[#allocation4 + $0x468] sm:$0xff]
    %v301 = vld [vmem:[#allocation4 + $0x470] sm:$0xff]
    %v302 = vld [vmem:[#allocation4 + $0x478] sm:$0xff]
    %v303 = vld [vmem:[#allocation4 + $0x480] sm:$0xff]
    %v304 = vld [vmem:[#allocation4 + $0x488] sm:$0xff]
    %v305 = vld [vmem:[#allocation4 + $0x490] sm:$0xff]
    %v306 = vld [vmem:[#allocation4 + $0x498] sm:$0xff]
    %v307 = vld [vmem:[#allocation4 + $0x4a0] sm:$0xff]
    %v308 = vld [vmem:[#allocation4 + $0x4a8] sm:$0xff]
    %v309 = vld [vmem:[#allocation4 + $0x4b0] sm:$0xff]
    %v310 = vld [vmem:[#allocation4 + $0x4b8] sm:$0xff]
    %v311 = vld [vmem:[#allocation4 + $0x4c0] sm:$0xff]
    %v312 = vld [vmem:[#allocation4 + $0x4c8] sm:$0xff]
    %v313 = vld [vmem:[#allocation4 + $0x4d0] sm:$0xff]
    %v314 = vld [vmem:[#allocation4 + $0x4d8] sm:$0xff]
    %v315 = vld [vmem:[#allocation4 + $0x4e0] sm:$0xff]
    %v316 = vld [vmem:[#allocation4 + $0x4e8] sm:$0xff]
    %v317 = vld [vmem:[#allocation4 + $0x4f0] sm:$0xff]
    %v318 = vld [vmem:[#allocation4 + $0x4f8] sm:$0xff]
    %v319 = vld [vmem:[#allocation4 + $0x500] sm:$0xff]
    %v320 = vld [vmem:[#allocation4 + $0x508] sm:$0xff]
    %v321 = vld [vmem:[#allocation4 + $0x510] sm:$0xff]
    %v322 = vld [vmem:[#allocation4 + $0x518] sm:$0xff]
    %v323 = vld [vmem:[#allocation4 + $0x520] sm:$0xff]
    %v324 = vld [vmem:[#allocation4 + $0x528] sm:$0xff]
    %v325 = vld [vmem:[#allocation4 + $0x530] sm:$0xff]
    %v326 = vld [vmem:[#allocation4 + $0x538] sm:$0xff]
    %v327 = vld [vmem:[#allocation4 + $0x540] sm:$0xff]
    %v328 = vld [vmem:[#allocation4 + $0x548] sm:$0xff]
    %v329 = vld [vmem:[#allocation4 + $0x550] sm:$0xff]
    %v330 = vld [vmem:[#allocation4 + $0x558] sm:$0xff]
    %v331 = vld [vmem:[#allocation4 + $0x560] sm:$0xff]
    %v332 = vld [vmem:[#allocation4 + $0x568] sm:$0xff]
    %v333 = vld [vmem:[#allocation4 + $0x570] sm:$0xff]
    %v334 = vld [vmem:[#allocation4 + $0x578] sm:$0xff]
    %v335 = vld [vmem:[#allocation4 + $0x580] sm:$0xff]
    %v336 = vld [vmem:[#allocation4 + $0x588] sm:$0xff]
    %v337 = vld [vmem:[#allocation4 + $0x590] sm:$0xff]
    %v338 = vld [vmem:[#allocation4 + $0x598] sm:$0xff]
    %v339 = vld [vmem:[#allocation4 + $0x5a0] sm:$0xff]
    %v340 = vld [vmem:[#allocation4 + $0x5a8] sm:$0xff]
    %v341 = vld [vmem:[#allocation4 + $0x5b0] sm:$0xff]
    %v342 = vld [vmem:[#allocation4 + $0x5b8] sm:$0xff]
    %v343 = vld [vmem:[#allocation4 + $0x5c0] sm:$0xff]
    %v344 = vld [vmem:[#allocation4 + $0x5c8] sm:$0xff]
    %v345 = vld [vmem:[#allocation4 + $0x5d0] sm:$0xff]
    %v346 = vld [vmem:[#allocation4 + $0x5d8] sm:$0xff]
    %v347 = vld [vmem:[#allocation4 + $0x5e0] sm:$0xff]
    %v348 = vld [vmem:[#allocation4 + $0x5e8] sm:$0xff]
    %v349 = vld [vmem:[#allocation4 + $0x5f0] sm:$0xff]
    %v350 = vld [vmem:[#allocation4 + $0x5f8] sm:$0xff]
    %351 = vmatprep.subr.mxu0 %v205
    %352 = vmatpush1.msra.mxu0 %v204
    %353 = vmatprep.subr.mxu0 %v202
    %354 = vmatpush1.msra.mxu0 %v201
    %355 = vmatprep.subr.mxu0 %v199
    %356 = vmatpush1.msra.mxu0 %v198
    %357 = vmatprep.subr.mxu0 %v196
    %358 = vmatpush1.msra.mxu0 %v195
    %359 = vmatprep.subr.mxu0 %v193
    %360 = vmatpush1.msra.mxu0 %v192
    %361 = vmatprep.subr.mxu0 %v190
    %362 = vmatpush1.msra.mxu0 %v189
    %363 = vmatprep.subr.mxu0 %v187
    %364 = vmatpush1.msra.mxu0 %v186
    %365 = vmatprep.subr.mxu0 %v184
    %366 = vmatpush1.msra.mxu0 %v183
    %367 = vmatprep.subr.mxu0 %v181
    %368 = vmatpush1.msra.mxu0 %v180
    %369 = vmatprep.subr.mxu0 %v178
    %370 = vmatpush1.msra.mxu0 %v177
    %371 = vmatprep.subr.mxu0 %v175
    %372 = vmatpush1.msra.mxu0 %v174
    %373 = vmatprep.subr.mxu0 %v172
    %374 = vmatpush1.msra.mxu0 %v171
    %375 = vmatprep.subr.mxu0 %v169
    %376 = vmatpush1.msra.mxu0 %v168
    %377 = vmatprep.subr.mxu0 %v166
    %378 = vmatpush1.msra.mxu0 %v165
    %379 = vmatprep.subr.mxu0 %v163
    %380 = vmatpush1.msra.mxu0 %v162
    %381 = vmatprep.subr.mxu0 %v160
    %382 = vmatpush1.msra.mxu0 %v159
    %383 = vmatprep.subr.mxu0 %v253
    %384 = vmatpush2.msra.mxu0 %v252
    %385 = vmatprep.subr.mxu0 %v250
    %386 = vmatpush2.msra.mxu0 %v249
    %387 = vmatprep.subr.mxu0 %v247
    %388 = vmatpush2.msra.mxu0 %v246
    %389 = vmatprep.subr.mxu0 %v244
    %390 = vmatpush2.msra.mxu0 %v243
    %391 = vmatprep.subr.mxu0 %v241
    %392 = vmatpush2.msra.mxu0 %v240
    %393 = vmatprep.subr.mxu0 %v238
    %394 = vmatpush2.msra.mxu0 %v237
    %395 = vmatprep.subr.mxu0 %v235
    %396 = vmatpush2.msra.mxu0 %v234
    %397 = vmatprep.subr.mxu0 %v232
    %398 = vmatpush2.msra.mxu0 %v231
    %399 = vmatprep.subr.mxu0 %v229
    %400 = vmatpush2.msra.mxu0 %v228
    %401 = vmatprep.subr.mxu0 %v226
    %402 = vmatpush2.msra.mxu0 %v225
    %403 = vmatprep.subr.mxu0 %v223
    %404 = vmatpush2.msra.mxu0 %v222
    %405 = vmatprep.subr.mxu0 %v220
    %406 = vmatpush2.msra.mxu0 %v219
    %407 = vmatprep.subr.mxu0 %v217
    %408 = vmatpush2.msra.mxu0 %v216
    %409 = vmatprep.subr.mxu0 %v214
    %410 = vmatpush2.msra.mxu0 %v213
    %411 = vmatprep.subr.mxu0 %v211
    %412 = vmatpush2.msra.mxu0 %v210
    %413 = vmatprep.subr.mxu0 %v208
    %414 = vmatpush2.msra.mxu0 %v207
    %415 = vmatprep.mubr.f32.mxu0 %v154
    %416 = vmatmul.mubr.f32.gmra.mxu0 %v153
    %v417 = vpop.f32.mrf.mxu0
    %v418 = vadd.f32 0.0, %v417
    %v419 = vpop.f32.mrf.mxu0
    %v420 = vadd.f32 0.0, %v419
    %421 = vdwg.mxu0
    %422 = vmatprep.subr.mxu0 %v301
    %423 = vmatpush1.msra.mxu0 %v300
    %424 = vmatprep.subr.mxu0 %v298
    %425 = vmatpush1.msra.mxu0 %v297
    %426 = vmatprep.subr.mxu0 %v295
    %427 = vmatpush1.msra.mxu0 %v294
    %428 = vmatprep.subr.mxu0 %v292
    %429 = vmatpush1.msra.mxu0 %v291
    %430 = vmatprep.subr.mxu0 %v289
    %431 = vmatpush1.msra.mxu0 %v288
    %432 = vmatprep.subr.mxu0 %v286
    %433 = vmatpush1.msra.mxu0 %v285
    %434 = vmatprep.subr.mxu0 %v283
    %435 = vmatpush1.msra.mxu0 %v282
    %436 = vmatprep.subr.mxu0 %v280
    %437 = vmatpush1.msra.mxu0 %v279
    %438 = vmatprep.subr.mxu0 %v277
    %439 = vmatpush1.msra.mxu0 %v276
    %440 = vmatprep.subr.mxu0 %v274
    %441 = vmatpush1.msra.mxu0 %v273
    %442 = vmatprep.subr.mxu0 %v271
    %443 = vmatpush1.msra.mxu0 %v270
    %444 = vmatprep.subr.mxu0 %v268
    %445 = vmatpush1.msra.mxu0 %v267
    %446 = vmatprep.subr.mxu0 %v265
    %447 = vmatpush1.msra.mxu0 %v264
    %448 = vmatprep.subr.mxu0 %v262
    %449 = vmatpush1.msra.mxu0 %v261
    %450 = vmatprep.subr.mxu0 %v259
    %451 = vmatpush1.msra.mxu0 %v258
    %452 = vmatprep.subr.mxu0 %v256
    %453 = vmatpush1.msra.mxu0 %v255
    %454 = vmatprep.subr.mxu0 %v349
    %455 = vmatpush2.msra.mxu0 %v348
    %456 = vmatprep.subr.mxu0 %v346
    %457 = vmatpush2.msra.mxu0 %v345
    %458 = vmatprep.subr.mxu0 %v343
    %459 = vmatpush2.msra.mxu0 %v342
    %460 = vmatprep.subr.mxu0 %v340
    %461 = vmatpush2.msra.mxu0 %v339
    %462 = vmatprep.subr.mxu0 %v337
    %463 = vmatpush2.msra.mxu0 %v336
    %464 = vmatprep.subr.mxu0 %v334
    %465 = vmatpush2.msra.mxu0 %v333
    %466 = vmatprep.subr.mxu0 %v331
    %467 = vmatpush2.msra.mxu0 %v330
    %468 = vmatprep.subr.mxu0 %v328
    %469 = vmatpush2.msra.mxu0 %v327
    %470 = vmatprep.subr.mxu0 %v325
    %471 = vmatpush2.msra.mxu0 %v324
    %472 = vmatprep.subr.mxu0 %v322
    %473 = vmatpush2.msra.mxu0 %v321
    %474 = vmatprep.subr.mxu0 %v319
    %475 = vmatpush2.msra.mxu0 %v318
    %476 = vmatprep.subr.mxu0 %v316
    %477 = vmatpush2.msra.mxu0 %v315
    %478 = vmatprep.subr.mxu0 %v313
    %479 = vmatpush2.msra.mxu0 %v312
    %480 = vmatprep.subr.mxu0 %v310
    %481 = vmatpush2.msra.mxu0 %v309
    %482 = vmatprep.subr.mxu0 %v307
    %483 = vmatpush2.msra.mxu0 %v306
    %484 = vmatprep.subr.mxu0 %v304
    %485 = vmatpush2.msra.mxu0 %v303
    %486 = vmatprep.mubr.f32.mxu0 %v158
    %487 = vmatmul.mubr.f32.gmra.mxu0 %v157
    %v488 = vpop.f32.mrf.mxu0
    %v489 = vadd.f32 %v418, %v488
    %v490 = vpop.f32.mrf.mxu0
    %v491 = vadd.f32 %v420, %v490
    %492 = vdwg.mxu0
    %493 = vmatprep.subr.mxu0 0.0
    %494 = vmatpush1.msra.mxu0 %v206
    %495 = vmatprep.subr.mxu0 0.0
    %496 = vmatpush1.msra.mxu0 %v203
    %497 = vmatprep.subr.mxu0 0.0
    %498 = vmatpush1.msra.mxu0 %v200
    %499 = vmatprep.subr.mxu0 0.0
    %500 = vmatpush1.msra.mxu0 %v197
    %501 = vmatprep.subr.mxu0 0.0
    %502 = vmatpush1.msra.mxu0 %v194
    %503 = vmatprep.subr.mxu0 0.0
    %504 = vmatpush1.msra.mxu0 %v191
    %505 = vmatprep.subr.mxu0 0.0
    %506 = vmatpush1.msra.mxu0 %v188
    %507 = vmatprep.subr.mxu0 0.0
    %508 = vmatpush1.msra.mxu0 %v185
    %509 = vmatprep.subr.mxu0 0.0
    %510 = vmatpush1.msra.mxu0 %v182
    %511 = vmatprep.subr.mxu0 0.0
    %512 = vmatpush1.msra.mxu0 %v179
    %513 = vmatprep.subr.mxu0 0.0
    %514 = vmatpush1.msra.mxu0 %v176
    %515 = vmatprep.subr.mxu0 0.0
    %516 = vmatpush1.msra.mxu0 %v173
    %517 = vmatprep.subr.mxu0 0.0
    %518 = vmatpush1.msra.mxu0 %v170
    %519 = vmatprep.subr.mxu0 0.0
    %520 = vmatpush1.msra.mxu0 %v167
    %521 = vmatprep.subr.mxu0 0.0
    %522 = vmatpush1.msra.mxu0 %v164
    %523 = vmatprep.subr.mxu0 0.0
    %524 = vmatpush1.msra.mxu0 %v161
    %525 = vmatprep.subr.mxu0 0.0
    %526 = vmatpush2.msra.mxu0 %v254
    %527 = vmatprep.subr.mxu0 0.0
    %528 = vmatpush2.msra.mxu0 %v251
    %529 = vmatprep.subr.mxu0 0.0
    %530 = vmatpush2.msra.mxu0 %v248
    %531 = vmatprep.subr.mxu0 0.0
    %532 = vmatpush2.msra.mxu0 %v245
    %533 = vmatprep.subr.mxu0 0.0
    %534 = vmatpush2.msra.mxu0 %v242
    %535 = vmatprep.subr.mxu0 0.0
    %536 = vmatpush2.msra.mxu0 %v239
    %537 = vmatprep.subr.mxu0 0.0
    %538 = vmatpush2.msra.mxu0 %v236
    %539 = vmatprep.subr.mxu0 0.0
    %540 = vmatpush2.msra.mxu0 %v233
    %541 = vmatprep.subr.mxu0 0.0
    %542 = vmatpush2.msra.mxu0 %v230
    %543 = vmatprep.subr.mxu0 0.0
    %544 = vmatpush2.msra.mxu0 %v227
    %545 = vmatprep.subr.mxu0 0.0
    %546 = vmatpush2.msra.mxu0 %v224
    %547 = vmatprep.subr.mxu0 0.0
    %548 = vmatpush2.msra.mxu0 %v221
    %549 = vmatprep.subr.mxu0 0.0
    %550 = vmatpush2.msra.mxu0 %v218
    %551 = vmatprep.subr.mxu0 0.0
    %552 = vmatpush2.msra.mxu0 %v215
    %553 = vmatprep.subr.mxu0 0.0
    %554 = vmatpush2.msra.mxu0 %v212
    %555 = vmatprep.subr.mxu0 0.0
    %556 = vmatpush2.msra.mxu0 %v209
    %557 = vmatprep.mubr.f32.mxu0 %v154
    %558 = vmatmul.mubr.f32.gmra.mxu0 %v153
    %v559 = vpop.f32.mrf.mxu0
    %v560 = vadd.f32 0.0, %v559
    %v561 = vpop.f32.mrf.mxu0
    %562 = vdwg.mxu0
    %563 = vmatprep.subr.mxu0 0.0
    %564 = vmatpush1.msra.mxu0 %v302
    %565 = vmatprep.subr.mxu0 0.0
    %566 = vmatpush1.msra.mxu0 %v299
    %567 = vmatprep.subr.mxu0 0.0
    %568 = vmatpush1.msra.mxu0 %v296
    %569 = vmatprep.subr.mxu0 0.0
    %570 = vmatpush1.msra.mxu0 %v293
    %571 = vmatprep.subr.mxu0 0.0
    %572 = vmatpush1.msra.mxu0 %v290
    %573 = vmatprep.subr.mxu0 0.0
    %574 = vmatpush1.msra.mxu0 %v287
    %575 = vmatprep.subr.mxu0 0.0
    %576 = vmatpush1.msra.mxu0 %v284
    %577 = vmatprep.subr.mxu0 0.0
    %578 = vmatpush1.msra.mxu0 %v281
    %579 = vmatprep.subr.mxu0 0.0
    %580 = vmatpush1.msra.mxu0 %v278
    %581 = vmatprep.subr.mxu0 0.0
    %582 = vmatpush1.msra.mxu0 %v275
    %583 = vmatprep.subr.mxu0 0.0
    %584 = vmatpush1.msra.mxu0 %v272
    %585 = vmatprep.subr.mxu0 0.0
    %586 = vmatpush1.msra.mxu0 %v269
    %587 = vmatprep.subr.mxu0 0.0
    %588 = vmatpush1.msra.mxu0 %v266
    %589 = vmatprep.subr.mxu0 0.0
    %590 = vmatpush1.msra.mxu0 %v263
    %591 = vmatprep.subr.mxu0 0.0
    %592 = vmatpush1.msra.mxu0 %v260
    %593 = vmatprep.subr.mxu0 0.0
    %594 = vmatpush1.msra.mxu0 %v257
    %595 = vmatprep.subr.mxu0 0.0
    %596 = vmatpush2.msra.mxu0 %v350
    %597 = vmatprep.subr.mxu0 0.0
    %598 = vmatpush2.msra.mxu0 %v347
    %599 = vmatprep.subr.mxu0 0.0
    %600 = vmatpush2.msra.mxu0 %v344
    %601 = vmatprep.subr.mxu0 0.0
    %602 = vmatpush2.msra.mxu0 %v341
    %603 = vmatprep.subr.mxu0 0.0
    %604 = vmatpush2.msra.mxu0 %v338
    %605 = vmatprep.subr.mxu0 0.0
    %606 = vmatpush2.msra.mxu0 %v335
    %607 = vmatprep.subr.mxu0 0.0
    %608 = vmatpush2.msra.mxu0 %v332
    %609 = vmatprep.subr.mxu0 0.0
    %610 = vmatpush2.msra.mxu0 %v329
    %611 = vmatprep.subr.mxu0 0.0
    %612 = vmatpush2.msra.mxu0 %v326
    %613 = vmatprep.subr.mxu0 0.0
    %614 = vmatpush2.msra.mxu0 %v323
    %615 = vmatprep.subr.mxu0 0.0
    %616 = vmatpush2.msra.mxu0 %v320
    %617 = vmatprep.subr.mxu0 0.0
    %618 = vmatpush2.msra.mxu0 %v317
    %619 = vmatprep.subr.mxu0 0.0
    %620 = vmatpush2.msra.mxu0 %v314
    %621 = vmatprep.subr.mxu0 0.0
    %622 = vmatpush2.msra.mxu0 %v311
    %623 = vmatprep.subr.mxu0 0.0
    %624 = vmatpush2.msra.mxu0 %v308
    %625 = vmatprep.subr.mxu0 0.0
    %626 = vmatpush2.msra.mxu0 %v305
    %627 = vmatprep.mubr.f32.mxu0 %v158
    %628 = vmatmul.mubr.f32.gmra.mxu0 %v157
    %v629 = vpop.f32.mrf.mxu0
    %v630 = vadd.f32 %v560, %v629
    %v631 = vpop.f32.mrf.mxu0
    %632 = vdwg.mxu0
    %633 = vst [vmem:[%s4] sm:$0xff] %v489
    %634 = vst [vmem:[%s4 + $0x8] sm:$0xff] %v491
    %635 = vst [vmem:[%s4 + $0x10] sm:$0xff] %v630
    // Predicated region
    $region26: #{decode.1} parent=1 // pred_check
      _
    $region27: #{decode.1} parent=1 // pred_check_branch
      %637 = sbr.rel (0) target = $region29
    $region28: #{decode.1} parent=1 // pred_region
      _
    $region29: #{decode.1} parent=1 // pred_fallthru
      _
    // Predicated region
    $region30: #{decode.1} parent=1 // pred_check
      _
    $region31: #{decode.1} parent=1 // pred_check_branch
      %639 = sbr.rel (0) target = $region33
    $region32: #{decode.1} parent=1 // pred_region
      _
    $region33: #{decode.1} parent=1 // pred_fallthru
      _
    %640 = vsyncpa [#allocation3], 1
    %641 = vsyncpa [#allocation5], 1

</llo_original>
